<compile_context>
chip_gen: v7x
topology: tpu7x:2x2x1
jax: 0.10.0
libtpu: 0.0.40
codegen_flags: <defaults>
</compile_context>

<pallas_src>
import functools
import math

import jax
import jax.numpy as jnp
from jax import lax
from jax.experimental import pallas as pl
from jax.experimental.pallas import tpu as pltpu


# ------------------------------ tiling helper ------------------------------- #

def _fit_tile(dim, desired, align):
    """Largest divisor of `dim` that is a multiple of `align` and <= desired, else full dim."""
    if dim <= desired:
        return dim
    best = dim
    t = align
    while t <= desired:
        if dim % t == 0:
            best = t
        t += align
    return best


# --------------------------- fused tiled matmul ------------------------------ #
# y = [gelu_new]( LN?(x) @ W + b ) [+ residual]     (GPT-2 Conv1D: W is (in, out))

def _fused_matmul_kernel(*refs, eps, has_ln, has_res, activation):
    x_ref, w_ref, b_ref = refs[0], refs[1], refs[2]
    idx = 3
    if has_ln:
        g_ref, beta_ref = refs[idx], refs[idx + 1]
        idx += 2
    if has_res:
        r_ref = refs[idx]
        idx += 1
    o_ref = refs[idx]
    acc_ref = refs[idx + 1]

    k_id = pl.program_id(2)
    nk = pl.num_programs(2)

    @pl.when(k_id == 0)
    def _():
        acc_ref[...] = jnp.zeros_like(acc_ref)

    x = x_ref[...]
    if has_ln:
        # LayerNorm prologue (requires the full feature dim in one K block).
        xf = x.astype(jnp.float32)
        mu = jnp.mean(xf, axis=-1, keepdims=True)
        var = jnp.mean(jnp.square(xf - mu), axis=-1, keepdims=True)   # biased, like torch
        xf = (xf - mu) * lax.rsqrt(var + eps)
        xf = xf * g_ref[...].astype(jnp.float32) + beta_ref[...].astype(jnp.float32)
        x = xf.astype(x_ref.dtype)          # keep MXU operand in the input dtype

    acc_ref[...] += jnp.dot(x, w_ref[...], preferred_element_type=jnp.float32)

    @pl.when(k_id == nk - 1)
    def _():
        y = acc_ref[...] + b_ref[...].astype(jnp.float32)
        if activation == "gelu_new":
            c = math.sqrt(2.0 / math.pi)
            y = 0.5 * y * (1.0 + jnp.tanh(c * (y + 0.044715 * y * y * y)))
        if has_res:
            y = y + r_ref[...].astype(jnp.float32)
        o_ref[...] = y.astype(o_ref.dtype)


def fused_matmul(x, w, b, *, ln=None, residual=None, activation=None,
                 eps=1e-5, tm=512, tn=512, tk=512):
    """Tiled Conv1D with optional fused LayerNorm prologue / gelu / residual epilogue."""
    M, K = x.shape
    K2, N = w.shape
    assert K == K2

    tm = _fit_tile(M, tm, 8)
    tn = _fit_tile(N, tn, 128)
    tk = K if ln is not None else _fit_tile(K, tk, 128)   # LN needs the full feature dim
    grid = (M // tm, N // tn, K // tk)

    inputs = [x, w, b.reshape(1, N)]
    in_specs = [
        pl.BlockSpec((tm, tk), lambda i, j, k: (i, k)),
        pl.BlockSpec((tk, tn), lambda i, j, k: (k, j)),
        pl.BlockSpec((1, tn), lambda i, j, k: (0, j)),
    ]
    if ln is not None:
        gamma, beta = ln
        inputs += [gamma.reshape(1, K), beta.reshape(1, K)]
        in_specs += [pl.BlockSpec((1, tk), lambda i, j, k: (0, k)),
                     pl.BlockSpec((1, tk), lambda i, j, k: (0, k))]
    if residual is not None:
        inputs.append(residual)
        in_specs.append(pl.BlockSpec((tm, tn), lambda i, j, k: (i, j)))

    kernel = functools.partial(_fused_matmul_kernel, eps=eps, has_ln=ln is not None,
                               has_res=residual is not None, activation=activation)

    return pl.pallas_call(
        kernel,
        out_shape=jax.ShapeDtypeStruct((M, N), x.dtype),
        grid_spec=pltpu.PrefetchScalarGridSpec(
            num_scalar_prefetch=0,
            grid=grid,
            in_specs=in_specs,
            out_specs=pl.BlockSpec((tm, tn), lambda i, j, k: (i, j)),
            scratch_shapes=[pltpu.VMEM((tm, tn), jnp.float32)]),
        compiler_params=pltpu.CompilerParams(
            dimension_semantics=("parallel", "parallel", "arbitrary")),
    )(*inputs)


# ------------------------------ attention kernel ----------------------------- #
# Per batch element: reads q/k/v from the fused qkv activation, applies the causal
# mask (== tril `bias` buffer), softmax, PV, and writes the merged-head layout plus
# `present` = (K, V) in (B,H,S,d) layout — no split/merge transposes, no stack copy.

def _attn_kernel(qkv_ref, o_ref, pres_ref, *, n_head, scale):
    S = qkv_ref.shape[1]
    E = qkv_ref.shape[2] // 3
    d = E // n_head

    row = lax.broadcasted_iota(jnp.int32, (S, S), 0)
    col = lax.broadcasted_iota(jnp.int32, (S, S), 1)
    causal = col <= row
    inv_sqrt_d = 1.0 / math.sqrt(d)

    head_outs = []
    for h in range(n_head):                       # static unroll, heads are independent
        q = qkv_ref[0, :, h * d:(h + 1) * d]              # (S, d)
        k = qkv_ref[0, :, E + h * d:E + (h + 1) * d]      # (S, d)
        v = qkv_ref[0, :, 2 * E + h * d:2 * E + (h + 1) * d]

        # present = (key, value) in (B, H, S, d) layout (matches stack(key^T, value)).
        pres_ref[0, 0, h] = k
        pres_ref[1, 0, h] = v

        # scores: contract last dims directly (no explicit k.T / XLU transpose)
        w = lax.dot_general(q, k, (((1,), (1,)), ((), ())),
                            preferred_element_type=jnp.float32)     # (S, S)
        if scale:
            w = w * inv_sqrt_d
        # w * bias - 10000 * (1 - bias)  ==  where(causal, w, -10000)
        w = jnp.where(causal, w, -10000.0)
        w = w - jnp.max(w, axis=-1, keepdims=True)
        e = jnp.exp(w)
        p = e * pl.reciprocal(jnp.sum(e, axis=-1, keepdims=True), approx=True)
        head_outs.append(
            lax.dot_general(p.astype(v.dtype), v, (((1,), (0,)), ((), ())),
                            preferred_element_type=jnp.float32))

    # single lane-dense store of the merged-head output (B, S, E layout)
    o_ref[0] = jnp.concatenate(head_outs, axis=-1).astype(o_ref.dtype)


def attn_core(qkv, *, n_head, scale):
    B, S, three_e = qkv.shape
    E = three_e // 3
    d = E // n_head
    kernel = functools.partial(_attn_kernel, n_head=n_head, scale=scale)
    return pl.pallas_call(
        kernel,
        out_shape=(jax.ShapeDtypeStruct((B, S, E), qkv.dtype),
                   jax.ShapeDtypeStruct((2, B, n_head, S, d), qkv.dtype)),
        grid=(B,),
        in_specs=[pl.BlockSpec((1, S, three_e), lambda b: (b, 0, 0))],
        out_specs=(pl.BlockSpec((1, S, E), lambda b: (b, 0, 0)),
                   pl.BlockSpec((2, 1, n_head, S, d), lambda b: (0, b, 0, 0, 0))),
        compiler_params=pltpu.CompilerParams(dimension_semantics=("parallel",)),
    )(qkv)


# ------------------------------- Block forward ------------------------------- #

def init_params(key, n_embd, n_head):
    del n_head
    ks = jax.random.split(key, 4)
    std = 0.02
    return {
        "ln1_g": jnp.ones((n_embd,), jnp.float32),
        "ln1_b": jnp.zeros((n_embd,), jnp.float32),
        "attn_w": std * jax.random.normal(ks[0], (n_embd, 3 * n_embd), jnp.float32),
        "attn_b": jnp.zeros((3 * n_embd,), jnp.float32),
        "proj_w": std * jax.random.normal(ks[1], (n_embd, n_embd), jnp.float32),
        "proj_b": jnp.zeros((n_embd,), jnp.float32),
        "ln2_g": jnp.ones((n_embd,), jnp.float32),
        "ln2_b": jnp.zeros((n_embd,), jnp.float32),
        "fc_w": std * jax.random.normal(ks[2], (n_embd, 4 * n_embd), jnp.float32),
        "fc_b": jnp.zeros((4 * n_embd,), jnp.float32),
        "mlp_proj_w": std * jax.random.normal(ks[3], (4 * n_embd, n_embd), jnp.float32),
        "mlp_proj_b": jnp.zeros((n_embd,), jnp.float32),
    }


def block_forward(x, params, n_head, *, scale=False, eps=1e-5):
    """Returns [x_out, present] matching Block.forward (no past / masks / attn weights)."""
    B, S, E = x.shape
    x2d = x.reshape(B * S, E)

    # ln_1 fused into c_attn prologue
    qkv2d = fused_matmul(x2d, params["attn_w"], params["attn_b"],
                         ln=(params["ln1_g"], params["ln1_b"]), eps=eps)
    qkv = qkv2d.reshape(B, S, 3 * E)

    # causal attention + present, straight from the fused qkv buffer
    a_bse, present = attn_core(qkv, n_head=n_head, scale=scale)

    # c_proj with the first residual fused into the epilogue
    x_mid2d = fused_matmul(a_bse.reshape(B * S, E), params["proj_w"], params["proj_b"],
                           residual=x2d)

    # ln_2 fused into c_fc prologue, gelu_new fused into its epilogue
    h2d = fused_matmul(x_mid2d, params["fc_w"], params["fc_b"],
                       ln=(params["ln2_g"], params["ln2_b"]), eps=eps,
                       activation="gelu_new")

    # mlp c_proj with the second residual fused into the epilogue
    out2d = fused_matmul(h2d, params["mlp_proj_w"], params["mlp_proj_b"],
                         residual=x_mid2d)

    return [out2d.reshape(B, S, E), present]


# ------------------------------ pure-JAX reference --------------------------- #

def ref_block_forward(x, params, n_head, *, scale=False, eps=1e-5):
    B, S, E = x.shape
    d = E // n_head

    def ln(v, g, b):
        mu = v.mean(-1, keepdims=True)
        var = ((v - mu) ** 2).mean(-1, keepdims=True)
        return (v - mu) / jnp.sqrt(var + eps) * g + b

    h = ln(x, params["ln1_g"], params["ln1_b"])
    qkv = h @ params["attn_w"] + params["attn_b"]
    q, k, v = jnp.split(qkv, 3, axis=-1)

    def split(t):
        return t.reshape(B, S, n_head, d).transpose(0, 2, 1, 3)

    qh, kh, vh = split(q), split(k), split(v)
    w = jnp.einsum("bhqd,bhkd->bhqk", qh, kh)
    if scale:
        w = w / math.sqrt(d)
    mask = jnp.tril(jnp.ones((S, S), jnp.float32))
    w = w * mask - 10000.0 * (1.0 - mask)
    w = jax.nn.softmax(w, axis=-1)
    a = jnp.einsum("bhqk,bhkd->bhqd", w, vh)
    a = a.transpose(0, 2, 1, 3).reshape(B, S, E)
    a = a @ params["proj_w"] + params["proj_b"]
    x1 = x + a

    h2 = ln(x1, params["ln2_g"], params["ln2_b"])
    m = h2 @ params["fc_w"] + params["fc_b"]
    c = math.sqrt(2.0 / math.pi)
    m = 0.5 * m * (1.0 + jnp.tanh(c * (m + 0.044715 * m ** 3)))
    m = m @ params["mlp_proj_w"] + params["mlp_proj_b"]
    x2 = x1 + m
    present = jnp.stack([kh, vh], axis=0)
    return x2, present


# ----------------------------------- main ------------------------------------ #

if __name__ == "__main__":
    B, S, E, H = 2, 8, 32, 4          # batch, seq (= n_ctx), n_embd, n_head
    key = jax.random.PRNGKey(0)
    k_x, k_p = jax.random.split(key)
    x = jax.random.normal(k_x, (B, S, E), jnp.float32)
    params = init_params(k_p, E, H)

    out, present = block_forward(x, params, H, scale=True, eps=1e-5)
    jax.block_until_ready(out)
    jax.block_until_ready(present)

    assert out.shape == (B, S, E)
    assert present.shape == (2, B, H, S, E // H)

    ref_out, ref_present = ref_block_forward(x, params, H, scale=True, eps=1e-5)
    err_out = float(jnp.max(jnp.abs(out - ref_out)))
    err_pres = float(jnp.max(jnp.abs(present - ref_present)))
    assert err_out < 1e-2 and err_pres < 1e-2, (err_out, err_pres)

    print("KERNEL_OK")
</pallas_src>

<mosaic_0001>
module attributes {stable_mosaic.version = 11 : i64} {
  func.func @_fused_matmul_kernel(%arg0: i32, %arg1: i32, %arg2: i32, %arg3: memref<16x32xf32, #tpu.memory_space<vmem>>, %arg4: memref<32x96xf32, #tpu.memory_space<vmem>>, %arg5: memref<1x96xf32, #tpu.memory_space<vmem>>, %arg6: memref<1x32xf32, #tpu.memory_space<vmem>>, %arg7: memref<1x32xf32, #tpu.memory_space<vmem>>, %arg8: memref<16x96xf32, #tpu.memory_space<vmem>>, %arg9: memref<16x96xf32, #tpu.memory_space<vmem>>) attributes {dimension_semantics = [#tpu.dimension_semantics<parallel>, #tpu.dimension_semantics<parallel>, #tpu.dimension_semantics<arbitrary>], iteration_bounds = array<i64: 1, 1, 1>, scalar_prefetch = 0 : i64, scratch_operands = 1 : i64, tpu.core_type = #tpu.core_type<tc>, window_params = [{transform_indices = @transform_0, window_bounds = array<i64: 16, 32>}, {transform_indices = @transform_1, window_bounds = array<i64: 32, 96>}, {transform_indices = @transform_2, window_bounds = array<i64: 1, 96>}, {transform_indices = @transform_3, window_bounds = array<i64: 1, 32>}, {transform_indices = @transform_4, window_bounds = array<i64: 1, 32>}, {transform_indices = @transform_5, window_bounds = array<i64: 16, 96>}]} {
    %c0_i32 = arith.constant 0 : i32
    %0 = arith.cmpi eq, %arg2, %c0_i32 : i32
    %1 = arith.extui %0 : i1 to i32
    %c0_i32_0 = arith.constant 0 : i32
    %2 = arith.cmpi ne, %1, %c0_i32_0 : i32
    scf.if %2 {
      %cst_19 = arith.constant 0.000000e+00 : f32
      %36 = vector.broadcast %cst_19 : f32 to vector<16x96xf32>
      %c0_20 = arith.constant 0 : index
      %c0_21 = arith.constant 0 : index
      %37 = vector.load %arg9[%c0_20, %c0_21] : memref<16x96xf32, #tpu.memory_space<vmem>>, vector<16x96xf32>
      tpu.vector_store %arg9[%c0_20, %c0_21], %36 {strides = array<i32>} : memref<16x96xf32, #tpu.memory_space<vmem>>, vector<16x96xf32>,
    } else {
    }
    %c0 = arith.constant 0 : index
    %c0_1 = arith.constant 0 : index
    %3 = vector.load %arg3[%c0, %c0_1] : memref<16x32xf32, #tpu.memory_space<vmem>>, vector<16x32xf32>
    %cst = arith.constant dense<0.000000e+00> : vector<16xf32>
    %4 = vector.multi_reduction <add>, %3, %cst [1] : vector<16x32xf32> to vector<16xf32>
    %5 = vector.shape_cast %4 : vector<16xf32> to vector<16x1xf32>
    %cst_2 = arith.constant 3.200000e+01 : f32
    %6 = vector.broadcast %cst_2 : f32 to vector<16x1xf32>
    %7 = arith.divf %5, %6 : vector<16x1xf32>
    %8 = vector.broadcast %7 : vector<16x1xf32> to vector<16x32xf32>
    %9 = arith.subf %3, %8 : vector<16x32xf32>
    %10 = arith.mulf %9, %9 : vector<16x32xf32>
    %cst_3 = arith.constant dense<0.000000e+00> : vector<16xf32>
    %11 = vector.multi_reduction <add>, %10, %cst_3 [1] : vector<16x32xf32> to vector<16xf32>
    %12 = vector.shape_cast %11 : vector<16xf32> to vector<16x1xf32>
    %cst_4 = arith.constant 3.200000e+01 : f32
    %13 = vector.broadcast %cst_4 : f32 to vector<16x1xf32>
    %14 = arith.divf %12, %13 : vector<16x1xf32>
    %15 = vector.broadcast %7 : vector<16x1xf32> to vector<16x32xf32>
    %16 = arith.subf %3, %15 : vector<16x32xf32>
    %cst_5 = arith.constant 9.99999974E-6 : f32
    %17 = vector.broadcast %cst_5 : f32 to vector<16x1xf32>
    %18 = arith.addf %14, %17 : vector<16x1xf32>
    %19 = math.rsqrt %18 : vector<16x1xf32>
    %20 = vector.broadcast %19 : vector<16x1xf32> to vector<16x32xf32>
    %21 = arith.mulf %16, %20 : vector<16x32xf32>
    %c0_6 = arith.constant 0 : index
    %c0_7 = arith.constant 0 : index
    %22 = vector.load %arg6[%c0_6, %c0_7] : memref<1x32xf32, #tpu.memory_space<vmem>>, vector<1x32xf32>
    %23 = vector.broadcast %22 : vector<1x32xf32> to vector<16x32xf32>
    %24 = arith.mulf %21, %23 : vector<16x32xf32>
    %c0_8 = arith.constant 0 : index
    %c0_9 = arith.constant 0 : index
    %25 = vector.load %arg7[%c0_8, %c0_9] : memref<1x32xf32, #tpu.memory_space<vmem>>, vector<1x32xf32>
    %26 = vector.broadcast %25 : vector<1x32xf32> to vector<16x32xf32>
    %27 = arith.addf %24, %26 : vector<16x32xf32>
    %c0_10 = arith.constant 0 : index
    %c0_11 = arith.constant 0 : index
    %28 = vector.load %arg9[%c0_10, %c0_11] : memref<16x96xf32, #tpu.memory_space<vmem>>, vector<16x96xf32>
    %c0_12 = arith.constant 0 : index
    %c0_13 = arith.constant 0 : index
    %29 = vector.load %arg4[%c0_12, %c0_13] : memref<32x96xf32, #tpu.memory_space<vmem>>, vector<32x96xf32>
    %cst_14 = arith.constant dense<0.000000e+00> : vector<16x96xf32>
    %30 = tpu.matmul %27, %29, %cst_14 {dimension_numbers = #tpu.dot_dimension_numbers<[1], [0], [0], [1], [0, 0, 1, 1], [], []>} : vector<16x32xf32>, vector<32x96xf32>, vector<16x96xf32> -> vector<16x96xf32>
    %31 = arith.addf %28, %30 : vector<16x96xf32>
    %c0_15 = arith.constant 0 : index
    %c0_16 = arith.constant 0 : index
    %32 = vector.load %arg9[%c0_15, %c0_16] : memref<16x96xf32, #tpu.memory_space<vmem>>, vector<16x96xf32>
    tpu.vector_store %arg9[%c0_15, %c0_16], %31 {strides = array<i32>} : memref<16x96xf32, #tpu.memory_space<vmem>>, vector<16x96xf32>,
    %c0_i32_17 = arith.constant 0 : i32
    %33 = arith.cmpi eq, %arg2, %c0_i32_17 : i32
    %34 = arith.extui %33 : i1 to i32
    %c0_i32_18 = arith.constant 0 : i32
    %35 = arith.cmpi ne, %34, %c0_i32_18 : i32
    scf.if %35 {
      %c0_19 = arith.constant 0 : index
      %c0_20 = arith.constant 0 : index
      %36 = vector.load %arg9[%c0_19, %c0_20] : memref<16x96xf32, #tpu.memory_space<vmem>>, vector<16x96xf32>
      %c0_21 = arith.constant 0 : index
      %c0_22 = arith.constant 0 : index
      %37 = vector.load %arg5[%c0_21, %c0_22] : memref<1x96xf32, #tpu.memory_space<vmem>>, vector<1x96xf32>
      %38 = vector.broadcast %37 : vector<1x96xf32> to vector<16x96xf32>
      %39 = arith.addf %36, %38 : vector<16x96xf32>
      %c0_23 = arith.constant 0 : index
      %c0_24 = arith.constant 0 : index
      %40 = vector.load %arg8[%c0_23, %c0_24] : memref<16x96xf32, #tpu.memory_space<vmem>>, vector<16x96xf32>
      tpu.vector_store %arg8[%c0_23, %c0_24], %39 {strides = array<i32>} : memref<16x96xf32, #tpu.memory_space<vmem>>, vector<16x96xf32>,
    } else {
    }
    return
  }
  func.func @transform_0(%arg0: i32, %arg1: i32, %arg2: i32) -> (i32, i32) {
    %c0_i32 = arith.constant 0 : i32
    return %arg0, %arg2 : i32, i32
  }
  func.func @transform_1(%arg0: i32, %arg1: i32, %arg2: i32) -> (i32, i32) {
    %c0_i32 = arith.constant 0 : i32
    return %arg2, %arg1 : i32, i32
  }
  func.func @transform_2(%arg0: i32, %arg1: i32, %arg2: i32) -> (i32, i32) {
    %c0_i32 = arith.constant 0 : i32
    %c0_i32_0 = arith.constant 0 : i32
    return %c0_i32, %arg1 : i32, i32
  }
  func.func @transform_3(%arg0: i32, %arg1: i32, %arg2: i32) -> (i32, i32) {
    %c0_i32 = arith.constant 0 : i32
    %c0_i32_0 = arith.constant 0 : i32
    return %c0_i32, %arg2 : i32, i32
  }
  func.func @transform_4(%arg0: i32, %arg1: i32, %arg2: i32) -> (i32, i32) {
    %c0_i32 = arith.constant 0 : i32
    %c0_i32_0 = arith.constant 0 : i32
    return %c0_i32, %arg2 : i32, i32
  }
  func.func @transform_5(%arg0: i32, %arg1: i32, %arg2: i32) -> (i32, i32) {
    %c0_i32 = arith.constant 0 : i32
    return %arg0, %arg1 : i32, i32
  }
}

</mosaic_0001>

<llo_original>
// kernel: tpu_custom_call.1
$region0: #{tpu_custom_call.1}
  #allocation0 [shape = 'u32[]', space=smem, size = 0x4, offset = 0x4, fixed_abs, tag = 'smem constant byte address 0x4 - core index']
  #allocation1 [shape = 'u32[144,128]{1,0:T(1,128)}', space=vmem, size = 0x12000, scoped, tag = 'internal scratch']
  #allocation2 [shape = 'f32[16,96]{1,0:T(8,128)}', space=vmem, size = 0x2000, scoped, tag = 'scratch operand']
  %s0 = inlined_call_operand.hbm [shape: f32[16,32], index: 0, kind: input, shape index: {}]
  %s1 = inlined_call_operand.hbm [shape: f32[32,96], index: 1, kind: input, shape index: {}]
  %s2 = inlined_call_operand.vmem [shape: f32[1,96], index: 2, kind: input, shape index: {}]
  %s3 = inlined_call_operand.vmem [shape: f32[1,32], index: 3, kind: input, shape index: {}]
  %s4 = inlined_call_operand.vmem [shape: f32[1,32], index: 4, kind: input, shape index: {}]
  %s5 = inlined_call_operand.hbm [shape: f32[16,96], index: 5, kind: output, shape index: {}]
  %s6 = sld [smem:[#allocation0]]
  $region46: #{tpu_custom_call.1} parent=0
    _
  %s8 = ssub.s32 1, %s6
  %s9 = scalar_select 0, %s8, %s6
  $region1: #{tpu_custom_call.1} parent=0
    #allocation3 [shape = 'u8[8192]{0}', space=vmem, size = 0x2000, scoped, tag = 'input window, operand 0, single buffered']
    #allocation4 [shape = 's32[1]{0}', space=sflag, size = 0x4, scoped, tag = 'scoped memory for tpu_custom_call.1']
    #allocation5 [shape = 's32[1]{0}', space=sflag, size = 0x4, scoped, tag = 'scoped memory for tpu_custom_call.1']
    #allocation6 [shape = 'u8[16384]{0}', space=vmem, size = 0x4000, scoped, tag = 'input window, operand 1, single buffered']
    #allocation7 [shape = 's32[1]{0}', space=sflag, size = 0x4, scoped, tag = 'scoped memory for tpu_custom_call.1']
    #allocation8 [shape = 'u8[8192]{0}', space=vmem, size = 0x2000, scoped, tag = 'output window, operand 0, single buffered']
    %10 = vsyncpa [#allocation4], 0
    %11 = vsyncpa [#allocation7], 0
    %12 = vsyncpa [#allocation5], 0
    // Predicated region
    $region2: #{tpu_custom_call.1} parent=1 // pred_check
      _
    $region3: #{tpu_custom_call.1} parent=1 // pred_check_branch
      %14 = sbr.rel (0) target = $region5
    $region4: #{tpu_custom_call.1} parent=1 // pred_region
      %s16 = ssub.s32 256, 256
      %17 = vsyncadd [#allocation4], %s16
      %s18 = sshll.u32 [#allocation3], 4
      %s19 = int_to_ptr.vmem [resolvable:$true] %s18
      %24 = dma.hbm_to_vmem [thread:$0]  %s0, 256, %s19, [#allocation4], 128, 128, 8
    $region5: #{tpu_custom_call.1} parent=1 // pred_fallthru
      _
    // Predicated region
    $region6: #{tpu_custom_call.1} parent=1 // pred_check
      _
    $region7: #{tpu_custom_call.1} parent=1 // pred_check_branch
      %26 = sbr.rel (0) target = $region9
    $region8: #{tpu_custom_call.1} parent=1 // pred_region
      %s28 = ssub.s32 512, 512
      %29 = vsyncadd [#allocation7], %s28
      %s30 = sshll.u32 [#allocation6], 4
      %s31 = int_to_ptr.vmem [resolvable:$true] %s30
      %36 = dma.hbm_to_vmem [thread:$0]  %s1, 512, %s31, [#allocation7], 128, 128, 8
    $region9: #{tpu_custom_call.1} parent=1 // pred_fallthru
      _
    // Predicated region
    $region10: #{tpu_custom_call.1} parent=1 // pred_check
      _
    $region11: #{tpu_custom_call.1} parent=1 // pred_check_branch
      %38 = sbr.rel (0) target = $region13
    $region12: #{tpu_custom_call.1} parent=1 // pred_region
      _
    $region13: #{tpu_custom_call.1} parent=1 // pred_fallthru
      _
    // Predicated region
    $region14: #{tpu_custom_call.1} parent=1 // pred_check
      _
    $region15: #{tpu_custom_call.1} parent=1 // pred_check_branch
      %40 = sbr.rel (0) target = $region17
    $region16: #{tpu_custom_call.1} parent=1 // pred_region
      _
    $region17: #{tpu_custom_call.1} parent=1 // pred_fallthru
      _
    // Predicated region
    $region18: #{tpu_custom_call.1} parent=1 // pred_check
      _
    $region19: #{tpu_custom_call.1} parent=1 // pred_check_branch
      %42 = sbr.rel (0) target = $region21
    $region20: #{tpu_custom_call.1} parent=1 // pred_region
      _
    $region21: #{tpu_custom_call.1} parent=1 // pred_fallthru
      _
    // Predicated region
    $region22: #{tpu_custom_call.1} parent=1 // pred_check
      _
    $region23: #{tpu_custom_call.1} parent=1 // pred_check_branch
      %44 = sbr.rel (0) target = $region25
    $region24: #{tpu_custom_call.1} parent=1 // pred_region
      %45 = dma.done [#allocation4], 256
    $region25: #{tpu_custom_call.1} parent=1 // pred_fallthru
      _
    // Predicated region
    $region26: #{tpu_custom_call.1} parent=1 // pred_check
      _
    $region27: #{tpu_custom_call.1} parent=1 // pred_check_branch
      %47 = sbr.rel (0) target = $region29
    $region28: #{tpu_custom_call.1} parent=1 // pred_region
      %48 = dma.done [#allocation7], 512
    $region29: #{tpu_custom_call.1} parent=1 // pred_fallthru
      _
    %p49 = scmp.eq.s32.totalorder 0, 0
    // Predicated region
    $region30: #{tpu_custom_call.1} parent=1 // pred_check
      %p50 = pneg %p49
    $region31: #{tpu_custom_call.1} parent=1 // pred_check_branch
      %52 = sbr.rel (%p50) target = $region33
    $region32: #{tpu_custom_call.1} parent=1 // pred_region
      %vm53 = vcmask 785408
      %54 = vst.msk [vmem:[#allocation2] sm:$0xff] %vm53, 0.0
      %55 = vst.msk [vmem:[#allocation2 + $0x8] sm:$0xff] %vm53, 0.0
    $region33: #{tpu_custom_call.1} parent=1 // pred_fallthru
      _
    %v56 = vld [vmem:[#allocation3] sm:$0xff]
    %v57 = vld [vmem:[#allocation3 + $0x8] sm:$0xff]
    %vm58 = vcmask 261120
    %v59 = vsel %vm58, %v56, 0.0
    %60 = vadd.xlane.f32.xlu0 %v59
    %v61 = vpop.xlane.xlu0 %60
    %v62 = vsel %vm58, %v57, 0.0
    %63 = vadd.xlane.f32.xlu0 %v62
    %v64 = vpop.xlane.xlu0 %63
    %v65 = vrcp.pop 32.0
    %v66 = vmul.f32 %v61, %v65
    %v67 = vmul.f32 %v64, %v65
    %v68 = vsub.f32 %v56, %v66
    %v69 = vsub.f32 %v57, %v67
    %v70 = vmul.f32 %v68, %v68
    %v71 = vmul.f32 %v69, %v69
    %v72 = vsel %vm58, %v70, 0.0
    %73 = vadd.xlane.f32.xlu0 %v72
    %v74 = vpop.xlane.xlu0 %73
    %v75 = vsel %vm58, %v71, 0.0
    %76 = vadd.xlane.f32.xlu0 %v75
    %v77 = vpop.xlane.xlu0 %76
    %v78 = vmul.f32 %v74, %v65
    %v79 = vmul.f32 %v77, %v65
    %v80 = vadd.f32 %v78, 1e-05
    %v81 = vadd.f32 %v79, 1e-05
    %v82 = vrsqrt.pop %v80
    %v83 = vrsqrt.pop %v81
    %v84 = vmul.f32 %v68, %v82
    %v85 = vmul.f32 %v69, %v83
    %v86 = vld [vmem:[%s3] sm:$0x1]
    %v88 = vlaneseq
    %v89 = vshrl.u32 %v88, 7
    %v90 = vsub.s32 0, %v89
    %v91 = vrot.slane %v86, %v90
    %v93 = vmul.f32 %v84, %v91
    %v94 = vmul.f32 %v85, %v91
    %v95 = vld [vmem:[%s4] sm:$0x1]
    %v97 = vlaneseq
    %v98 = vshrl.u32 %v97, 7
    %v99 = vsub.s32 0, %v98
    %v100 = vrot.slane %v95, %v99
    %v102 = vadd.f32 %v93, %v100
    %v103 = vadd.f32 %v94, %v100
    %v104 = vld [vmem:[#allocation2] sm:$0xff]
    %v105 = vld [vmem:[#allocation2 + $0x8] sm:$0xff]
    %v106 = vld [vmem:[#allocation6] sm:$0xff]
    %v107 = vld [vmem:[#allocation6 + $0x8] sm:$0xff]
    %v108 = vld [vmem:[#allocation6 + $0x10] sm:$0xff]
    %v109 = vld [vmem:[#allocation6 + $0x18] sm:$0xff]
    %v111 = vsel %vm58, %v102, 0
    %v114 = vsel %vm58, %v103, 0
    %116 = vmatprep.subr.mxu0 0.0
    %117 = vmatpush1.msra.mxu0 %v106
    %118 = vmatprep.subr.mxu0 0.0
    %119 = vmatpush1.msra.mxu0 %v107
    %120 = vmatprep.subr.mxu0 0.0
    %121 = vmatpush1.msra.mxu0 %v108
    %122 = vmatprep.subr.mxu0 0.0
    %123 = vmatpush1.msra.mxu0 %v109
    %124 = vmatprep.subr.mxu0 0.0
    %125 = vmatpush1.msra.mxu0 0.0
    %126 = vmatprep.subr.mxu0 0.0
    %127 = vmatpush1.msra.mxu0 0.0
    %128 = vmatprep.subr.mxu0 0.0
    %129 = vmatpush1.msra.mxu0 0.0
    %130 = vmatprep.subr.mxu0 0.0
    %131 = vmatpush1.msra.mxu0 0.0
    %132 = vmatprep.subr.mxu0 0.0
    %133 = vmatpush1.msra.mxu0 0.0
    %134 = vmatprep.subr.mxu0 0.0
    %135 = vmatpush1.msra.mxu0 0.0
    %136 = vmatprep.subr.mxu0 0.0
    %137 = vmatpush1.msra.mxu0 0.0
    %138 = vmatprep.subr.mxu0 0.0
    %139 = vmatpush1.msra.mxu0 0.0
    %140 = vmatprep.subr.mxu0 0.0
    %141 = vmatpush1.msra.mxu0 0.0
    %142 = vmatprep.subr.mxu0 0.0
    %143 = vmatpush1.msra.mxu0 0.0
    %144 = vmatprep.subr.mxu0 0.0
    %145 = vmatpush1.msra.mxu0 0.0
    %146 = vmatprep.subr.mxu0 0.0
    %147 = vmatpush1.msra.mxu0 0.0
    %148 = vmatprep.subr.mxu0 0.0
    %149 = vmatpush1.msra.mxu0 0.0
    %150 = vmatprep.subr.mxu0 0.0
    %151 = vmatpush1.msra.mxu0 0.0
    %152 = vmatprep.subr.mxu0 0.0
    %153 = vmatpush1.msra.mxu0 0.0
    %154 = vmatprep.subr.mxu0 0.0
    %155 = vmatpush1.msra.mxu0 0.0
    %156 = vmatprep.subr.mxu0 0.0
    %157 = vmatpush1.msra.mxu0 0.0
    %158 = vmatprep.subr.mxu0 0.0
    %159 = vmatpush1.msra.mxu0 0.0
    %160 = vmatprep.subr.mxu0 0.0
    %161 = vmatpush1.msra.mxu0 0.0
    %162 = vmatprep.subr.mxu0 0.0
    %163 = vmatpush1.msra.mxu0 0.0
    %164 = vmatprep.subr.mxu0 0.0
    %165 = vmatpush1.msra.mxu0 0.0
    %166 = vmatprep.subr.mxu0 0.0
    %167 = vmatpush1.msra.mxu0 0.0
    %168 = vmatprep.subr.mxu0 0.0
    %169 = vmatpush1.msra.mxu0 0.0
    %170 = vmatprep.subr.mxu0 0.0
    %171 = vmatpush1.msra.mxu0 0.0
    %172 = vmatprep.subr.mxu0 0.0
    %173 = vmatpush1.msra.mxu0 0.0
    %174 = vmatprep.subr.mxu0 0.0
    %175 = vmatpush1.msra.mxu0 0.0
    %176 = vmatprep.subr.mxu0 0.0
    %177 = vmatpush1.msra.mxu0 0.0
    %178 = vmatprep.subr.mxu0 0.0
    %179 = vmatpush1.msra.mxu0 0.0
    %180 = vmatprep.mubr.f32.mxu0 0.0
    %181 = vmatmul.mubr.f32.gmra.mrb[0].mxu0 %v111
    %v182 = vpop.f32.mrb[0].mxu0
    %v183 = vadd.f32 0.0, %v182
    %v184 = vpop.f32.mrb[0].mxu0
    %185 = vmatprep.mubr.f32.mxu0 0.0
    %186 = vmatmul.mubr.f32.gmra.mrb[0].mxu0 %v114
    %v187 = vpop.f32.mrb[0].mxu0
    %v188 = vadd.f32 0.0, %v187
    %v189 = vpop.f32.mrb[0].mxu0
    %190 = vdwg.mxu0
    %v191 = vadd.f32 %v104, %v183
    %v192 = vadd.f32 %v105, %v188
    %vm193 = vcmask 785408
    %194 = vst.msk [vmem:[#allocation2] sm:$0xff] %vm193, %v191
    %195 = vst.msk [vmem:[#allocation2 + $0x8] sm:$0xff] %vm193, %v192
    // Predicated region
    $region34: #{tpu_custom_call.1} parent=1 // pred_check
      %p196 = pneg %p49
    $region35: #{tpu_custom_call.1} parent=1 // pred_check_branch
      %198 = sbr.rel (%p196) target = $region37
    $region36: #{tpu_custom_call.1} parent=1 // pred_region
      %v199 = vld [vmem:[#allocation2] sm:$0xff]
      %v200 = vld [vmem:[#allocation2 + $0x8] sm:$0xff]
      %v201 = vld [vmem:[%s2] sm:$0x1]
      %v203 = vlaneseq
      %v204 = vshrl.u32 %v203, 7
      %v205 = vsub.s32 0, %v204
      %v206 = vrot.slane %v201, %v205
      %v208 = vadd.f32 %v199, %v206
      %v209 = vadd.f32 %v200, %v206
      %210 = vst.msk [vmem:[#allocation8] sm:$0xff] %vm193, %v208
      %211 = vst.msk [vmem:[#allocation8 + $0x8] sm:$0xff] %vm193, %v209
    $region37: #{tpu_custom_call.1} parent=1 // pred_fallthru
      _
    // Predicated region
    $region38: #{tpu_custom_call.1} parent=1 // pred_check
      _
    $region39: #{tpu_custom_call.1} parent=1 // pred_check_branch
      %213 = sbr.rel (0) target = $region41
    $region40: #{tpu_custom_call.1} parent=1 // pred_region
      %s215 = ssub.s32 256, 256
      %216 = vsyncadd [#allocation5], %s215
      %s217 = sshll.u32 [#allocation8], 4
      %s218 = int_to_ptr.vmem [resolvable:$true] %s217
      %223 = dma.vmem_to_hbm [thread:$0]  %s218, 256, %s5, [#allocation5], 128, 128, 8
    $region41: #{tpu_custom_call.1} parent=1 // pred_fallthru
      _
    // Predicated region
    $region42: #{tpu_custom_call.1} parent=1 // pred_check
      _
    $region43: #{tpu_custom_call.1} parent=1 // pred_check_branch
      %225 = sbr.rel (0) target = $region45
    $region44: #{tpu_custom_call.1} parent=1 // pred_region
      %226 = dma.done [#allocation5], 256
    $region45: #{tpu_custom_call.1} parent=1 // pred_fallthru
      _
    %227 = vsyncpa [#allocation4], 1
    %228 = vsyncpa [#allocation7], 1
    %229 = vsyncpa [#allocation5], 1

</llo_original>
